<compile_context>
chip_gen: v6e
topology: v6e:2x2x1
jax: 0.10.0
libtpu: 0.0.40
codegen_flags: <defaults>
</compile_context>

<pallas_src>
import functools

import jax
import jax.numpy as jnp
from jax.experimental import pallas as pl
from jax.experimental.pallas import tpu as pltpu

_TEMP = 10000.0
_STEP = 1e-4


def _timestep_loss_kernel(sched_ref, xy_ref, w1_ref, wtb_ref, w2_ref, out_ref,
                          *, alpha, gamma, temp, step, B, K):
    N = B * K

    sched = sched_ref[0]                         # (N + B, Cs) packed slab
    G = sched[:N, :2 * B + 2]                    # (N, 2B+2) affine mix matrix
    tj = sched[N:N + B, :K]                      # (B, K) raw timejumps

    # ---- distinctness loss ---------------------------------------------
    # torch.triu over the last two dims (j, k) of the broadcast (i, j, k)
    # tensor, diagonal=1; masked-out entries contribute exp(0) = 1, exactly
    # like the PyTorch code.
    j_idx = jax.lax.broadcasted_iota(jnp.int32, (B, K), 0)
    k_idx = jax.lax.broadcasted_iota(jnp.int32, (B, K), 1)
    keep = k_idx >= j_idx + 1                                  # triu(diag=1) over (j, k)
    diff = jnp.abs(tj[:, None, :] - tj[None, :, :])            # (B, B, K)
    masked = jnp.where(keep[None, :, :], diff, 0.0)
    distinct = jnp.sum(jnp.sum(jnp.exp(-masked / temp), axis=0))

    # ---- negative total acceleration (objective) -------------------------
    # X = t*target + (1-t)*noise, so
    #   pre = X@W1 + t*wt1 + b1 = (1-t)*(noise@W1) + t*(target@W1) + t*wt1 + b1
    # One fused matmul over the stacked [noise; target], then the tiny mix
    # matmul G @ V performs the per-(b,k) row replication, t-scaling and bias
    # adds in one MXU op (no repeat_interleave, no (B*K, D) operands).
    xy = xy_ref[0]                                             # (2B, D): [noise; target]
    xw = jnp.dot(xy, w1_ref[...], preferred_element_type=jnp.float32)   # (2B, H)
    V = jnp.concatenate([xw, wtb_ref[...]], axis=0)            # (2B+2, H): [nw1; tw1; wt1; b1]
    pre = jnp.dot(G, V, preferred_element_type=jnp.float32)    # (N, H) shared pre-activation

    wt1 = wtb_ref[0:1, :]                                      # (1, H)
    h = jnp.tanh(pre)                                          # hidden of vt_model(X, t)
    hh = jnp.tanh(pre - step * wt1)                            # hidden of vt_model(X, t-step)

    # vt - vth = (h - hh) @ W2  (b2 cancels) -> single second-layer matmul.
    vdiff = jnp.dot(h - hh, w2_ref[...], preferred_element_type=jnp.float32)  # (N, D)
    total_neg_accel = -jnp.sum(jnp.abs(vdiff)) / step          # -sum(|(vt-vth)/step|)

    loss = alpha * distinct + gamma * total_neg_accel
    # Lane-dense (1,1,128) store (unmasked vst); wrapper slices [:, 0, 0].
    out_ref[...] = jnp.broadcast_to(loss, out_ref.shape).astype(jnp.float32)


@functools.partial(jax.jit, static_argnames=("alpha", "gamma"))
def timestep_loss_batched(timejumps, input_noise, target_generation, params,
                          alpha=1.0, gamma=0.5):
    """P independent TimestepLoss problems in one pallas_call -> (P,) losses."""
    P, B, K = timejumps.shape
    D = input_noise.shape[-1]
    H = params["w1"].shape[1]
    N = B * K
    Cs = max(2 * B + 2, K)

    # Wrapper-side glue (plain JAX): build the per-instance slab packing the
    # affine mix matrix G and the raw timejumps into ONE operand.
    #   pre-row n (= b*K + k) mixes: noise@W1[b] * (1-t), target@W1[b] * t,
    #   wt1 * t, b1 * 1.
    t_flat = timejumps.reshape(P, N)                               # row n = b*K + k
    one_hot = (jnp.arange(N)[:, None] // K
               == jnp.arange(B)[None, :]).astype(jnp.float32)      # (N, B)
    tcol = t_flat[..., None]                                       # (P, N, 1)
    G = jnp.concatenate(
        [one_hot[None] * (1.0 - tcol),                 # -> noise@W1 rows, weight (1-t)
         one_hot[None] * tcol,                         # -> target@W1 rows, weight t
         tcol,                                         # -> wt1, weight t
         jnp.ones((P, N, 1), jnp.float32)],            # -> b1, weight 1
        axis=-1)                                                   # (P, N, 2B+2)
    sched = jnp.zeros((P, N + B, Cs), jnp.float32)
    sched = sched.at[:, :N, :2 * B + 2].set(G)
    sched = sched.at[:, N:, :K].set(timejumps)

    xy = jnp.concatenate([input_noise, target_generation], axis=1)  # (P, 2B, D)
    wtb = jnp.concatenate([params["wt1"], params["b1"]], axis=0)    # (2, H)

    kernel = functools.partial(_timestep_loss_kernel, alpha=alpha, gamma=gamma,
                               temp=_TEMP, step=_STEP, B=B, K=K)
    out = pl.pallas_call(
        kernel,
        out_shape=jax.ShapeDtypeStruct((P, 1, 128), jnp.float32),
        grid=(P,),
        in_specs=[
            pl.BlockSpec((1, N + B, Cs), lambda p: (p, 0, 0)),   # per-instance slab
            pl.BlockSpec((1, 2 * B, D), lambda p: (p, 0, 0)),    # [noise; target]
            pl.BlockSpec((D, H), lambda p: (0, 0)),              # W1 (shared)
            pl.BlockSpec((2, H), lambda p: (0, 0)),              # [wt1; b1] (shared)
            pl.BlockSpec((H, D), lambda p: (0, 0)),              # W2 (shared)
        ],
        out_specs=pl.BlockSpec((1, 1, 128), lambda p: (p, 0, 0)),
        compiler_params=pltpu.CompilerParams(
            dimension_semantics=("parallel",)),
    )(sched, xy, params["w1"], wtb, params["w2"])
    return out[:, 0, 0]


def timestep_loss(timejumps, input_noise, target_generation, params,
                  alpha=1.0, gamma=0.5):
    """Scalar forward of TimestepLoss for one (B, K) problem instance."""
    losses = timestep_loss_batched(timejumps[None], input_noise[None],
                                   target_generation[None], params,
                                   alpha=alpha, gamma=gamma)
    return losses[0]


def timestep_loss_reference(timejumps, input_noise, target_generation, params,
                            alpha=1.0, gamma=0.5):
    """Plain-JAX reference mirroring the PyTorch semantics exactly."""
    temp, step = _TEMP, _STEP
    B, K = timejumps.shape
    pairwise = jnp.abs(timejumps[:, None, :] - timejumps[None, :, :])  # (B,B,K)
    triu = (jnp.arange(K)[None, :] >= jnp.arange(B)[:, None] + 1)      # (B,K) over (j,k)
    pairwise = jnp.where(triu[None, :, :], pairwise, 0.0)
    distinct = jnp.sum(jnp.exp(-pairwise / temp))

    noise_rep = jnp.repeat(input_noise, K, axis=0)
    target_rep = jnp.repeat(target_generation, K, axis=0)
    t = timejumps.reshape(-1, 1)
    x = t * target_rep + (1.0 - t) * noise_rep

    def vt_model(xv, tv):
        h = jnp.tanh(xv @ params["w1"] + tv * params["wt1"] + params["b1"])
        return h @ params["w2"] + params["b2"]

    accel = jnp.abs((vt_model(x, t) - vt_model(x, t - step)) / step)
    return alpha * distinct + gamma * (-jnp.sum(accel))


if __name__ == "__main__":
    B, K, D, H = 2, 8, 128, 128   # batch, timejumps-per-sample, feature dim, hidden
    P = 4                         # independent loss instances per pallas_call

    key = jax.random.PRNGKey(0)
    k_tj, k_noise, k_tgt, k_w1, k_wt1, k_b1, k_w2, k_b2 = jax.random.split(key, 8)

    output_timejumps = jax.random.uniform(k_tj, (P, B, K), jnp.float32)
    input_noise = jax.random.normal(k_noise, (P, B, D), jnp.float32)
    target_generation = jax.random.normal(k_tgt, (P, B, D), jnp.float32)

    # deterministic synthetic weights for the velocity model (vt_model)
    params = dict(
        w1=jax.random.normal(k_w1, (D, H), jnp.float32) / jnp.sqrt(jnp.float32(D)),
        wt1=jax.random.normal(k_wt1, (1, H), jnp.float32),
        b1=0.1 * jax.random.normal(k_b1, (1, H), jnp.float32),
        w2=jax.random.normal(k_w2, (H, D), jnp.float32) / jnp.sqrt(jnp.float32(H)),
        b2=0.1 * jax.random.normal(k_b2, (1, D), jnp.float32),
    )

    # batched call: P problems, one kernel launch (amortized overhead)
    losses = jax.block_until_ready(
        timestep_loss_batched(output_timejumps, input_noise, target_generation,
                              params))

    # single-instance call preserving the module's scalar forward semantics
    loss0 = jax.block_until_ready(
        timestep_loss(output_timejumps[0], input_noise[0], target_generation[0],
                      params))

    refs = jnp.stack([
        timestep_loss_reference(output_timejumps[p], input_noise[p],
                                target_generation[p], params)
        for p in range(P)
    ])

    assert losses.shape == (P,)
    assert bool(jnp.all(jnp.isfinite(losses))), "kernel produced non-finite loss"
    # finite-difference (/1e-4) amplifies f32 rounding, so tolerance is loose
    # (the fused kernel's factored form differs from the reference only in
    # rounding of the shared pre-activation).
    assert jnp.allclose(losses, refs, rtol=5e-2, atol=2.0), (losses, refs)
    assert jnp.allclose(loss0, refs[0], rtol=5e-2, atol=2.0), (loss0, refs[0])

    print("KERNEL_OK")
</pallas_src>

<mosaic_0001>
module attributes {stable_mosaic.version = 11 : i64} {
  func.func @_timestep_loss_kernel(%arg0: i32, %arg1: memref<1x18x8xf32, #tpu.memory_space<vmem>>, %arg2: memref<1x4x128xf32, #tpu.memory_space<vmem>>, %arg3: memref<128x128xf32, #tpu.memory_space<vmem>>, %arg4: memref<2x128xf32, #tpu.memory_space<vmem>>, %arg5: memref<128x128xf32, #tpu.memory_space<vmem>>, %arg6: memref<1x1x128xf32, #tpu.memory_space<vmem>>) attributes {dimension_semantics = [#tpu.dimension_semantics<parallel>], iteration_bounds = array<i64: 4>, scalar_prefetch = 0 : i64, scratch_operands = 0 : i64, tpu.core_type = #tpu.core_type<tc>, window_params = [{transform_indices = @transform_0, window_bounds = array<i64: 1, 18, 8>}, {transform_indices = @transform_1, window_bounds = array<i64: 1, 4, 128>}, {pipeline_mode = #tpu.pipeline_mode<synchronous>, transform_indices = @transform_2, window_bounds = array<i64: 128, 128>}, {pipeline_mode = #tpu.pipeline_mode<synchronous>, transform_indices = @transform_3, window_bounds = array<i64: 2, 128>}, {pipeline_mode = #tpu.pipeline_mode<synchronous>, transform_indices = @transform_4, window_bounds = array<i64: 128, 128>}, {transform_indices = @transform_5, window_bounds = array<i64: 1, 1, 128>}]} {
    %c0 = arith.constant 0 : index
    %c0_0 = arith.constant 0 : index
    %c0_1 = arith.constant 0 : index
    %0 = vector.load %arg1[%c0, %c0_0, %c0_1] : memref<1x18x8xf32, #tpu.memory_space<vmem>>, vector<1x18x8xf32>
    %1 = vector.shape_cast %0 : vector<1x18x8xf32> to vector<18x8xf32>
    %2 = vector.extract_strided_slice %1 {offsets = [0, 0], sizes = [16, 6], strides = [1, 1]} : vector<18x8xf32> to vector<16x6xf32>
    %3 = vector.extract_strided_slice %1 {offsets = [16, 0], sizes = [2, 8], strides = [1, 1]} : vector<18x8xf32> to vector<2x8xf32>
    %4 = tpu.iota {dimensions = array<i32: 0>} : vector<2x8xi32>
    %5 = tpu.iota {dimensions = array<i32: 1>} : vector<2x8xi32>
    %c1_i32 = arith.constant 1 : i32
    %6 = vector.broadcast %c1_i32 : i32 to vector<2x8xi32>
    %7 = arith.addi %4, %6 : vector<2x8xi32>
    %8 = arith.cmpi sge, %5, %7 : vector<2x8xi32>
    %9 = vector.shape_cast %3 : vector<2x8xf32> to vector<2x1x8xf32>
    %10 = vector.shape_cast %3 : vector<2x8xf32> to vector<1x2x8xf32>
    %11 = vector.broadcast %9 : vector<2x1x8xf32> to vector<2x2x8xf32>
    %12 = vector.broadcast %10 : vector<1x2x8xf32> to vector<2x2x8xf32>
    %13 = arith.subf %11, %12 : vector<2x2x8xf32>
    %14 = math.absf %13 : vector<2x2x8xf32>
    %15 = vector.shape_cast %8 : vector<2x8xi1> to vector<1x2x8xi1>
    %cst = arith.constant 0.000000e+00 : f32
    %16 = vector.shape_cast %15 : vector<1x2x8xi1> to vector<1x2x8xi1>
    %17 = vector.broadcast %16 : vector<1x2x8xi1> to vector<2x2x8xi1>
    %18 = vector.broadcast %cst : f32 to vector<2x2x8xf32>
    %19 = arith.select %17, %14, %18 : vector<2x2x8xi1>, vector<2x2x8xf32>
    %cst_2 = arith.constant 0.000000e+00 : f32
    %20 = vector.broadcast %cst_2 : f32 to vector<2x2x8xf32>
    %21 = arith.subf %20, %19 : vector<2x2x8xf32>
    %cst_3 = arith.constant 1.000000e+04 : f32
    %22 = vector.broadcast %cst_3 : f32 to vector<2x2x8xf32>
    %23 = arith.divf %21, %22 : vector<2x2x8xf32>
    %24 = math.exp %23 : vector<2x2x8xf32>
    %cst_4 = arith.constant dense<0.000000e+00> : vector<2x8xf32>
    %25 = vector.multi_reduction <add>, %24, %cst_4 [0] : vector<2x2x8xf32> to vector<2x8xf32>
    %26 = vector.shape_cast %25 : vector<2x8xf32> to vector<1x2x8xf32>
    %cst_5 = arith.constant dense<0.000000e+00> : vector<1xf32>
    %27 = vector.multi_reduction <add>, %26, %cst_5 [1, 2] : vector<1x2x8xf32> to vector<1xf32>
    %28 = vector.shape_cast %27 : vector<1xf32> to vector<1x1x1xf32>
    %29 = vector.extract %28[0, 0, 0] : f32 from vector<1x1x1xf32>
    %c0_6 = arith.constant 0 : index
    %c0_7 = arith.constant 0 : index
    %c0_8 = arith.constant 0 : index
    %30 = vector.load %arg2[%c0_6, %c0_7, %c0_8] : memref<1x4x128xf32, #tpu.memory_space<vmem>>, vector<1x4x128xf32>
    %31 = vector.shape_cast %30 : vector<1x4x128xf32> to vector<4x128xf32>
    %c0_9 = arith.constant 0 : index
    %c0_10 = arith.constant 0 : index
    %32 = vector.load %arg3[%c0_9, %c0_10] : memref<128x128xf32, #tpu.memory_space<vmem>>, vector<128x128xf32>
    %cst_11 = arith.constant dense<0.000000e+00> : vector<4x128xf32>
    %33 = tpu.matmul %31, %32, %cst_11 {dimension_numbers = #tpu.dot_dimension_numbers<[1], [0], [0], [1], [0, 0, 1, 1], [], []>} : vector<4x128xf32>, vector<128x128xf32>, vector<4x128xf32> -> vector<4x128xf32>
    %c0_12 = arith.constant 0 : index
    %c0_13 = arith.constant 0 : index
    %34 = vector.load %arg4[%c0_12, %c0_13] : memref<2x128xf32, #tpu.memory_space<vmem>>, vector<2x128xf32>
    %35 = tpu.concatenate %33, %34 in 0 : vector<4x128xf32>, vector<2x128xf32> -> vector<6x128xf32>
    %cst_14 = arith.constant dense<0.000000e+00> : vector<16x128xf32>
    %36 = tpu.matmul %2, %35, %cst_14 {dimension_numbers = #tpu.dot_dimension_numbers<[1], [0], [0], [1], [0, 0, 1, 1], [], []>} : vector<16x6xf32>, vector<6x128xf32>, vector<16x128xf32> -> vector<16x128xf32>
    %c0_15 = arith.constant 0 : index
    %c0_16 = arith.constant 0 : index
    %37 = vector.load %arg4[%c0_15, %c0_16] : memref<2x128xf32, #tpu.memory_space<vmem>>, vector<1x128xf32>
    %38 = math.tanh %36 : vector<16x128xf32>
    %cst_17 = arith.constant 9.99999974E-5 : f32
    %39 = vector.broadcast %cst_17 : f32 to vector<1x128xf32>
    %40 = arith.mulf %39, %37 : vector<1x128xf32>
    %41 = vector.broadcast %40 : vector<1x128xf32> to vector<16x128xf32>
    %42 = arith.subf %36, %41 : vector<16x128xf32>
    %43 = math.tanh %42 : vector<16x128xf32>
    %44 = arith.subf %38, %43 : vector<16x128xf32>
    %c0_18 = arith.constant 0 : index
    %c0_19 = arith.constant 0 : index
    %45 = vector.load %arg5[%c0_18, %c0_19] : memref<128x128xf32, #tpu.memory_space<vmem>>, vector<128x128xf32>
    %cst_20 = arith.constant dense<0.000000e+00> : vector<16x128xf32>
    %46 = tpu.matmul %44, %45, %cst_20 {dimension_numbers = #tpu.dot_dimension_numbers<[1], [0], [0], [1], [0, 0, 1, 1], [], []>} : vector<16x128xf32>, vector<128x128xf32>, vector<16x128xf32> -> vector<16x128xf32>
    %47 = math.absf %46 : vector<16x128xf32>
    %48 = vector.shape_cast %47 : vector<16x128xf32> to vector<1x16x128xf32>
    %cst_21 = arith.constant dense<0.000000e+00> : vector<1xf32>
    %49 = vector.multi_reduction <add>, %48, %cst_21 [1, 2] : vector<1x16x128xf32> to vector<1xf32>
    %50 = vector.shape_cast %49 : vector<1xf32> to vector<1x1x1xf32>
    %51 = vector.extract %50[0, 0, 0] : f32 from vector<1x1x1xf32>
    %cst_22 = arith.constant 0.000000e+00 : f32
    %52 = arith.subf %cst_22, %51 : f32
    %cst_23 = arith.constant 9.99999974E-5 : f32
    %53 = arith.divf %52, %cst_23 : f32
    %cst_24 = arith.constant 1.000000e+00 : f32
    %54 = arith.mulf %cst_24, %29 : f32
    %cst_25 = arith.constant 5.000000e-01 : f32
    %55 = arith.mulf %cst_25, %53 : f32
    %56 = arith.addf %54, %55 : f32
    %57 = vector.broadcast %56 : f32 to vector<1x1x128xf32>
    %c0_26 = arith.constant 0 : index
    %c0_27 = arith.constant 0 : index
    %c0_28 = arith.constant 0 : index
    %58 = vector.load %arg6[%c0_26, %c0_27, %c0_28] : memref<1x1x128xf32, #tpu.memory_space<vmem>>, vector<1x1x128xf32>
    tpu.vector_store %arg6[%c0_26, %c0_27, %c0_28], %57 {strides = array<i32>} : memref<1x1x128xf32, #tpu.memory_space<vmem>>, vector<1x1x128xf32>,
    return
  }
  func.func @transform_0(%arg0: i32) -> (i32, i32, i32) {
    %c0_i32 = arith.constant 0 : i32
    %c0_i32_0 = arith.constant 0 : i32
    %c0_i32_1 = arith.constant 0 : i32
    return %arg0, %c0_i32, %c0_i32_0 : i32, i32, i32
  }
  func.func @transform_1(%arg0: i32) -> (i32, i32, i32) {
    %c0_i32 = arith.constant 0 : i32
    %c0_i32_0 = arith.constant 0 : i32
    %c0_i32_1 = arith.constant 0 : i32
    return %arg0, %c0_i32, %c0_i32_0 : i32, i32, i32
  }
  func.func @transform_2(%arg0: i32) -> (i32, i32) {
    %c0_i32 = arith.constant 0 : i32
    %c0_i32_0 = arith.constant 0 : i32
    %c0_i32_1 = arith.constant 0 : i32
    return %c0_i32, %c0_i32_0 : i32, i32
  }
  func.func @transform_3(%arg0: i32) -> (i32, i32) {
    %c0_i32 = arith.constant 0 : i32
    %c0_i32_0 = arith.constant 0 : i32
    %c0_i32_1 = arith.constant 0 : i32
    return %c0_i32, %c0_i32_0 : i32, i32
  }
  func.func @transform_4(%arg0: i32) -> (i32, i32) {
    %c0_i32 = arith.constant 0 : i32
    %c0_i32_0 = arith.constant 0 : i32
    %c0_i32_1 = arith.constant 0 : i32
    return %c0_i32, %c0_i32_0 : i32, i32
  }
  func.func @transform_5(%arg0: i32) -> (i32, i32, i32) {
    %c0_i32 = arith.constant 0 : i32
    %c0_i32_0 = arith.constant 0 : i32
    %c0_i32_1 = arith.constant 0 : i32
    return %arg0, %c0_i32, %c0_i32_0 : i32, i32, i32
  }
}

</mosaic_0001>

<llo_original>
// kernel: timestep_loss_batched.1
$region0: #{timestep_loss_batched.1}
  #allocation0 [shape = 'u32[]', space=smem, size = 0x4, offset = 0x4, fixed_abs, tag = 'smem constant byte address 0x4 - core index']
  #allocation1 [shape = 'u32[144,128]{1,0:T(1,128)}', space=vmem, size = 0x12000, scoped, tag = 'internal scratch']
  %s0 = inlined_call_operand.vmem [shape: f32[4,18,8], index: 0, kind: input, shape index: {}]
  %s1 = inlined_call_operand.vmem [shape: f32[4,4,128], index: 1, kind: input, shape index: {}]
  %s2 = inlined_call_operand.vmem [shape: f32[128,128], index: 2, kind: input, shape index: {}]
  %s3 = inlined_call_operand.vmem [shape: f32[2,128], index: 3, kind: input, shape index: {}]
  %s4 = inlined_call_operand.vmem [shape: f32[128,128], index: 4, kind: input, shape index: {}]
  %s5 = inlined_call_operand.vmem [shape: f32[4,1,128], index: 5, kind: output, shape index: {}]
  %s6 = sld [smem:[#allocation0]]
  $region53: #{timestep_loss_batched.1} parent=0
    _
  %s8 = ssub.s32 1, %s6
  %s9 = scalar_select 0, %s8, %s6
  loop: start=0, step=1, limit=6
  $region2: #{timestep_loss_batched.1} parent=0 // loop_pre_header
    _
  $region3: #{timestep_loss_batched.1} parent=0 // loop_header
    %s11 = sphi 0, %s15
    %p12 = scmp.ge.s32.totalorder %s11, 6
    %s21 = sphi 0, %s23
    %s24 = sphi 0, %s21
    %s25 = sphi 0, %s24
    %s41 = sphi 0, %s25
    %s47 = sphi 0, %s49
    %s50 = sphi 0, %s47
    %s51 = sphi 0, %s50
    %s67 = sphi 0, %s51
    %s71 = sphi 0, %s71
    %s73 = sphi 0, %s71
    %s74 = sphi 0, %s73
    %s88 = sphi 0, %s74
    %s92 = sphi 0, %s92
    %s94 = sphi 0, %s92
    %s95 = sphi 0, %s94
    %s109 = sphi 0, %s95
    %s113 = sphi 0, %s113
    %s115 = sphi 0, %s113
    %s116 = sphi 0, %s115
    %s130 = sphi 0, %s116
    %s136 = sphi 0, %s138
    %s139 = sphi 0, %s136
    %s140 = sphi 0, %s139
    %s156 = sphi 0, %s140
  $region4: #{timestep_loss_batched.1} parent=0 // loop_header_branch
    %14 = sbr.rel (%p12) target = $region8
  $region5: #{timestep_loss_batched.1} parent=0 // loop_body
    %s16 = ssub.s32 %s11, 1
    %s17 = ssub.s32 %s11, 2
    %s18 = sadd.s32 %s11, 1
    %s19 = ssub.s32 %s11, %s18
    %p20 = scmp.eq.s32.totalorder %s19, 0
    %s22 = sadd.s32 %s21, 1
    %s23 = scalar_select %p20, %s21, %s22
    %p26 = pneg %p20
    %p27 = scmp.eq.s32.totalorder %s11, 3
    %p28 = por %p26, %p27
    %p29 = scmp.ne.s32.totalorder %s21, %s24
    %p30 = scmp.eq.s32.totalorder %s11, 0
    %p31 = por %p29, %p30
    %p32 = scmp.ne.s32.totalorder %s21, %s24
    %p33 = scmp.eq.s32.totalorder %s16, 3
    %p34 = por %p32, %p33
    %p35 = scmp.ne.s32.totalorder %s24, %s25
    %p36 = scmp.eq.s32.totalorder %s16, 0
    %p37 = por %p35, %p36
    %p38 = scmp.ne.s32.totalorder %s24, %s25
    %p39 = scmp.eq.s32.totalorder %s17, 3
    %p40 = por %p38, %p39
    %p42 = scmp.ne.s32.totalorder %s25, %s41
    %p43 = scmp.eq.s32.totalorder %s17, 0
    %p44 = por %p42, %p43
    %s45 = ssub.s32 %s11, %s18
    %p46 = scmp.eq.s32.totalorder %s45, 0
    %s48 = sadd.s32 %s47, 1
    %s49 = scalar_select %p46, %s47, %s48
    %p52 = pneg %p46
    %p53 = scmp.eq.s32.totalorder %s11, 3
    %p54 = por %p52, %p53
    %p55 = scmp.ne.s32.totalorder %s47, %s50
    %p56 = scmp.eq.s32.totalorder %s11, 0
    %p57 = por %p55, %p56
    %p58 = scmp.ne.s32.totalorder %s47, %s50
    %p59 = scmp.eq.s32.totalorder %s16, 3
    %p60 = por %p58, %p59
    %p61 = scmp.ne.s32.totalorder %s50, %s51
    %p62 = scmp.eq.s32.totalorder %s16, 0
    %p63 = por %p61, %p62
    %p64 = scmp.ne.s32.totalorder %s50, %s51
    %p65 = scmp.eq.s32.totalorder %s17, 3
    %p66 = por %p64, %p65
    %p68 = scmp.ne.s32.totalorder %s51, %s67
    %p69 = scmp.eq.s32.totalorder %s17, 0
    %p70 = por %p68, %p69
    %s72 = sadd.s32 %s71, 1
    %p75 = scmp.eq.s32.totalorder %s11, 3
    %p76 = scmp.ne.s32.totalorder %s71, %s73
    %p77 = scmp.eq.s32.totalorder %s11, 0
    %p78 = por %p76, %p77
    %p79 = scmp.ne.s32.totalorder %s71, %s73
    %p80 = scmp.eq.s32.totalorder %s16, 3
    %p81 = por %p79, %p80
    %p82 = scmp.ne.s32.totalorder %s73, %s74
    %p83 = scmp.eq.s32.totalorder %s16, 0
    %p84 = por %p82, %p83
    %p85 = scmp.ne.s32.totalorder %s73, %s74
    %p86 = scmp.eq.s32.totalorder %s17, 3
    %p87 = por %p85, %p86
    %p89 = scmp.ne.s32.totalorder %s74, %s88
    %p90 = scmp.eq.s32.totalorder %s17, 0
    %p91 = por %p89, %p90
    %s93 = sadd.s32 %s92, 1
    %p96 = scmp.eq.s32.totalorder %s11, 3
    %p97 = scmp.ne.s32.totalorder %s92, %s94
    %p98 = scmp.eq.s32.totalorder %s11, 0
    %p99 = por %p97, %p98
    %p100 = scmp.ne.s32.totalorder %s92, %s94
    %p101 = scmp.eq.s32.totalorder %s16, 3
    %p102 = por %p100, %p101
    %p103 = scmp.ne.s32.totalorder %s94, %s95
    %p104 = scmp.eq.s32.totalorder %s16, 0
    %p105 = por %p103, %p104
    %p106 = scmp.ne.s32.totalorder %s94, %s95
    %p107 = scmp.eq.s32.totalorder %s17, 3
    %p108 = por %p106, %p107
    %p110 = scmp.ne.s32.totalorder %s95, %s109
    %p111 = scmp.eq.s32.totalorder %s17, 0
    %p112 = por %p110, %p111
    %s114 = sadd.s32 %s113, 1
    %p117 = scmp.eq.s32.totalorder %s11, 3
    %p118 = scmp.ne.s32.totalorder %s113, %s115
    %p119 = scmp.eq.s32.totalorder %s11, 0
    %p120 = por %p118, %p119
    %p121 = scmp.ne.s32.totalorder %s113, %s115
    %p122 = scmp.eq.s32.totalorder %s16, 3
    %p123 = por %p121, %p122
    %p124 = scmp.ne.s32.totalorder %s115, %s116
    %p125 = scmp.eq.s32.totalorder %s16, 0
    %p126 = por %p124, %p125
    %p127 = scmp.ne.s32.totalorder %s115, %s116
    %p128 = scmp.eq.s32.totalorder %s17, 3
    %p129 = por %p127, %p128
    %p131 = scmp.ne.s32.totalorder %s116, %s130
    %p132 = scmp.eq.s32.totalorder %s17, 0
    %p133 = por %p131, %p132
    %s134 = ssub.s32 %s11, %s18
    %p135 = scmp.eq.s32.totalorder %s134, 0
    %s137 = sadd.s32 %s136, 1
    %s138 = scalar_select %p135, %s136, %s137
    %p141 = pneg %p135
    %p142 = scmp.eq.s32.totalorder %s11, 3
    %p143 = por %p141, %p142
    %p144 = scmp.ne.s32.totalorder %s136, %s139
    %p145 = scmp.eq.s32.totalorder %s11, 0
    %p146 = por %p144, %p145
    %p147 = scmp.ne.s32.totalorder %s136, %s139
    %p148 = scmp.eq.s32.totalorder %s16, 3
    %p149 = por %p147, %p148
    %p150 = scmp.ne.s32.totalorder %s139, %s140
    %p151 = scmp.eq.s32.totalorder %s16, 0
    %p152 = por %p150, %p151
    %p153 = scmp.ne.s32.totalorder %s139, %s140
    %p154 = scmp.eq.s32.totalorder %s17, 3
    %p155 = por %p153, %p154
    %p157 = scmp.ne.s32.totalorder %s140, %s156
    %p158 = scmp.eq.s32.totalorder %s17, 0
    %p159 = por %p157, %p158
    %p160 = scmp.le.s32.totalorder 1, %s11
    %p161 = scmp.lt.s32.totalorder %s11, 5
    %p162 = pnand %p160, %p161
    %p163 = pneg %p162
    // Predicated region
    $region9: #{timestep_loss_batched.1} parent=5 // pred_check
      _
    $region10: #{timestep_loss_batched.1} parent=5 // pred_check_branch
      %165 = sbr.rel (%p162) target = $region12
    $region11: #{timestep_loss_batched.1} parent=5 // pred_region
      %s166 = ssub.s32 %s11, 1
      // Predicated region
      $region13: #{timestep_loss_batched.1} parent=11 // pred_check
        %p167 = pneg %p84
      $region14: #{timestep_loss_batched.1} parent=11 // pred_check_branch
        %169 = sbr.rel (%p167) target = $region16
      $region15: #{timestep_loss_batched.1} parent=11 // pred_region
        _
      $region16: #{timestep_loss_batched.1} parent=11 // pred_fallthru
        _
      // Predicated region
      $region17: #{timestep_loss_batched.1} parent=11 // pred_check
        %p170 = pneg %p105
      $region18: #{timestep_loss_batched.1} parent=11 // pred_check_branch
        %172 = sbr.rel (%p170) target = $region20
      $region19: #{timestep_loss_batched.1} parent=11 // pred_region
        _
      $region20: #{timestep_loss_batched.1} parent=11 // pred_fallthru
        _
      // Predicated region
      $region21: #{timestep_loss_batched.1} parent=11 // pred_check
        %p173 = pneg %p126
      $region22: #{timestep_loss_batched.1} parent=11 // pred_check_branch
        %175 = sbr.rel (%p173) target = $region24
      $region23: #{timestep_loss_batched.1} parent=11 // pred_region
        _
      $region24: #{timestep_loss_batched.1} parent=11 // pred_fallthru
        _
    $region12: #{timestep_loss_batched.1} parent=5 // pred_fallthru
      _
    %p176 = scmp.lt.s32.totalorder %s11, 4
    // Predicated region
    $region25: #{timestep_loss_batched.1} parent=5 // pred_check
      %p177 = pneg %p176
    $region26: #{timestep_loss_batched.1} parent=5 // pred_check_branch
      %179 = sbr.rel (%p177) target = $region28
    $region27: #{timestep_loss_batched.1} parent=5 // pred_region
      // Predicated region
      $region29: #{timestep_loss_batched.1} parent=27 // pred_check
        %p180 = pneg %p31
      $region30: #{timestep_loss_batched.1} parent=27 // pred_check_branch
        %182 = sbr.rel (%p180) target = $region32
      $region31: #{timestep_loss_batched.1} parent=27 // pred_region
        %p183 = scmp.lt.s32.totalorder %s11, 3
        %s184 = scalar_select %p183, %s11, 3
        %s185 = smul.addr %s184, 3
        %s186 = smul.addr %s185, 8
        %s187 = scalar_lea.vmem %s0, %s186
      $region32: #{timestep_loss_batched.1} parent=27 // pred_fallthru
        _
      // Predicated region
      $region33: #{timestep_loss_batched.1} parent=27 // pred_check
        %p188 = pneg %p57
      $region34: #{timestep_loss_batched.1} parent=27 // pred_check_branch
        %190 = sbr.rel (%p188) target = $region36
      $region35: #{timestep_loss_batched.1} parent=27 // pred_region
        %p191 = scmp.lt.s32.totalorder %s11, 3
        %s192 = scalar_select %p191, %s11, 3
        %s193 = smul.addr %s192, 4
        %s194 = scalar_lea.vmem %s1, %s193
      $region36: #{timestep_loss_batched.1} parent=27 // pred_fallthru
        _
    $region28: #{timestep_loss_batched.1} parent=5 // pred_fallthru
      _
    %p195 = scmp.le.s32.totalorder 1, %s11
    %p196 = scmp.lt.s32.totalorder %s11, 5
    %p197 = pnand %p195, %p196
    %p198 = pneg %p197
    // Predicated region
    $region37: #{timestep_loss_batched.1} parent=5 // pred_check
      _
    $region38: #{timestep_loss_batched.1} parent=5 // pred_check_branch
      %200 = sbr.rel (%p197) target = $region40
    $region39: #{timestep_loss_batched.1} parent=5 // pred_region
      %s201 = ssub.s32 %s11, 1
      %p202 = scmp.lt.s32.totalorder %s16, 3
      %s203 = scalar_select %p202, %s16, 3
      %s204 = smul.addr %s203, 3
      %s205 = smul.addr %s204, 8
      %s206 = scalar_lea.vmem %s0, %s205
      %p207 = pneg %p37
      %p208 = pneg %p34
      %p209 = scmp.lt.s32.totalorder %s16, 3
      %s210 = scalar_select %p209, %s16, 3
      %s211 = smul.addr %s210, 4
      %s212 = scalar_lea.vmem %s1, %s211
      %p213 = pneg %p63
      %p214 = pneg %p60
      %p215 = pneg %p84
      %p216 = pneg %p81
      %p217 = pneg %p105
      %p218 = pneg %p102
      %p219 = pneg %p126
      %p220 = pneg %p123
      %p221 = pneg %p152
      %p222 = pneg %p149
      %p223 = scmp.lt.s32.totalorder %s16, 3
      %s224 = scalar_select %p223, %s16, 3
      %s225 = scalar_lea.vmem %s5, %s224
      %p226 = scmp.lt.s32.totalorder %s16, 3
      %s227 = scalar_select %p226, %s16, 3
      %s228 = smul.addr %s227, 3
      %s229 = smul.addr %s228, 8
      %s230 = scalar_lea.vmem %s0, %s229
      %p231 = scmp.lt.s32.totalorder %s16, 3
      %s232 = scalar_select %p231, %s16, 3
      %s233 = smul.addr %s232, 4
      %s234 = scalar_lea.vmem %s1, %s233
      %p235 = scmp.lt.s32.totalorder %s16, 3
      %s236 = scalar_select %p235, %s16, 3
      %s237 = scalar_lea.vmem %s5, %s236
      %v238 = vld [vmem:[%s230] sm:$0xff]
      %v239 = vld [vmem:[%s230 + $0x8] sm:$0xff]
      %v240 = vld [vmem:[%s230 + $0x10] sm:$0x3]
      %v241 = vlaneseq
      %v242 = vshrl.u32 %v241, 7
      %v243 = vlaneseq
      %v244 = vand.u32 %v243, 127
      %v245 = vadd.s32 %v242, 1
      %vm246 = vcmp.ge.s32.totalorder %v244, %v245
      %v249 = vunpack.c.l.s4 1966171168
      %v250 = vunpack.c.0.s8 %v249
      %v251 = vlaneseq
      %v252 = vshrl.u32 %v251, 7
      %v253 = vsub.s32 %v250, %v252
      %v254 = vrot.slane %v240, %v253
      %v255 = vcombine.high %v254, %v254
      %v257 = vunpack.c.l.s4 1966171168
      %v258 = vunpack.c.0.s8 %v257
      %v259 = vlaneseq
      %v260 = vshrl.u32 %v259, 7
      %v261 = vsub.s32 %v258, %v260
      %v262 = vrot.slane %v254, %v261
      %v264 = vunpack.c.l.s4 1966171168
      %v265 = vunpack.c.0.s8 %v264
      %v266 = vlaneseq
      %v267 = vshrl.u32 %v266, 7
      %v268 = vsub.s32 %v265, %v267
      %v269 = vrot.slane %v255, %v268
      %v270 = vlaneseq
      %v271 = vshrl.u32 %v270, 7
      %v272 = vsub.s32 0, %v271
      %v273 = vrot.slane %v262, %v272
      %v274 = vlaneseq
      %v275 = vshrl.u32 %v274, 7
      %v276 = vsub.s32 0, %v275
      %v277 = vrot.slane %v269, %v276
      %v280 = vsub.f32 %v273, %v240
      %v281 = vsub.f32 %v277, %v240
      %v282 = vand.u32 2147483647, %v280
      %v283 = vand.u32 2147483647, %v281
      %v284 = vsel %vm246, 1, 0
      %vm285 = vcmp.eq.s32.totalorder %v284, 1
      %v286 = vsel %vm285, %v282, 0.0
      %v287 = vsel %vm285, %v283, 0.0
      %v288 = vsub.f32 0.0, %v286
      %v289 = vsub.f32 0.0, %v287
      %v290 = vrcp.pop 10000.0
      %v291 = vmul.f32 %v288, %v290
      %v292 = vmul.f32 %v289, %v290
      %v293 = vmul.f32 %v291, 1.442695
      %v294 = vpow.pop %v293
      %v295 = vmul.f32 %v292, 1.442695
      %v296 = vpow.pop %v295
      %vm297 = vcmask 58368
      %v298 = vsel %vm297, %v294, 0.0
      %v299 = vsel %vm297, %v296, 0.0
      %v300 = vadd.f32 %v298, %v299
      %v301 = vsel %vm297, %v300, 0.0
      %302 = vadd.xlane.f32.xlu0 %v301
      %v303 = vpop.xlane.xlu0 %302
      %v304 = vrot.slane %v303, 4
      %v305 = vadd.f32 %v303, %v304
      %v306 = vrot.slane %v305, 2
      %v307 = vadd.f32 %v305, %v306
      %v308 = vrot.slane %v307, 1
      %v309 = vadd.f32 %v307, %v308
      %s310 = vtos %v309
      %v311 = vld [vmem:[%s234] sm:$0xf]
      %v312 = vld [vmem:[%s2] sm:$0xff]
      %v313 = vld [vmem:[%s2 + $0x8] sm:$0xff]
      %v314 = vld [vmem:[%s2 + $0x10] sm:$0xff]
      %v315 = vld [vmem:[%s2 + $0x18] sm:$0xff]
      %v316 = vld [vmem:[%s2 + $0x20] sm:$0xff]
      %v317 = vld [vmem:[%s2 + $0x28] sm:$0xff]
      %v318 = vld [vmem:[%s2 + $0x30] sm:$0xff]
      %v319 = vld [vmem:[%s2 + $0x38] sm:$0xff]
      %v320 = vld [vmem:[%s2 + $0x40] sm:$0xff]
      %v321 = vld [vmem:[%s2 + $0x48] sm:$0xff]
      %v322 = vld [vmem:[%s2 + $0x50] sm:$0xff]
      %v323 = vld [vmem:[%s2 + $0x58] sm:$0xff]
      %v324 = vld [vmem:[%s2 + $0x60] sm:$0xff]
      %v325 = vld [vmem:[%s2 + $0x68] sm:$0xff]
      %v326 = vld [vmem:[%s2 + $0x70] sm:$0xff]
      %v327 = vld [vmem:[%s2 + $0x78] sm:$0xff]
      %328 = vmatprep.subr.mxu0 0.0
      %329 = vmatpush1.msra.mxu0 %v327
      %330 = vmatprep.subr.mxu0 0.0
      %331 = vmatpush1.msra.mxu0 %v326
      %332 = vmatprep.subr.mxu0 0.0
      %333 = vmatpush1.msra.mxu0 %v325
      %334 = vmatprep.subr.mxu0 0.0
      %335 = vmatpush1.msra.mxu0 %v324
      %336 = vmatprep.subr.mxu0 0.0
      %337 = vmatpush1.msra.mxu0 %v323
      %338 = vmatprep.subr.mxu0 0.0
      %339 = vmatpush1.msra.mxu0 %v322
      %340 = vmatprep.subr.mxu0 0.0
      %341 = vmatpush1.msra.mxu0 %v321
      %342 = vmatprep.subr.mxu0 0.0
      %343 = vmatpush1.msra.mxu0 %v320
      %344 = vmatprep.subr.mxu0 0.0
      %345 = vmatpush1.msra.mxu0 %v319
      %346 = vmatprep.subr.mxu0 0.0
      %347 = vmatpush1.msra.mxu0 %v318
      %348 = vmatprep.subr.mxu0 0.0
      %349 = vmatpush1.msra.mxu0 %v317
      %350 = vmatprep.subr.mxu0 0.0
      %351 = vmatpush1.msra.mxu0 %v316
      %352 = vmatprep.subr.mxu0 0.0
      %353 = vmatpush1.msra.mxu0 %v315
      %354 = vmatprep.subr.mxu0 0.0
      %355 = vmatpush1.msra.mxu0 %v314
      %356 = vmatprep.subr.mxu0 0.0
      %357 = vmatpush1.msra.mxu0 %v313
      %358 = vmatprep.subr.mxu0 0.0
      %359 = vmatpush1.msra.mxu0 %v312
      %360 = vmatprep.subr.mxu0 0.0
      %361 = vmatpush2.msra.mxu0 0.0
      %362 = vmatprep.subr.mxu0 0.0
      %363 = vmatpush2.msra.mxu0 0.0
      %364 = vmatprep.subr.mxu0 0.0
      %365 = vmatpush2.msra.mxu0 0.0
      %366 = vmatprep.subr.mxu0 0.0
      %367 = vmatpush2.msra.mxu0 0.0
      %368 = vmatprep.subr.mxu0 0.0
      %369 = vmatpush2.msra.mxu0 0.0
      %370 = vmatprep.subr.mxu0 0.0
      %371 = vmatpush2.msra.mxu0 0.0
      %372 = vmatprep.subr.mxu0 0.0
      %373 = vmatpush2.msra.mxu0 0.0
      %374 = vmatprep.subr.mxu0 0.0
      %375 = vmatpush2.msra.mxu0 0.0
      %376 = vmatprep.subr.mxu0 0.0
      %377 = vmatpush2.msra.mxu0 0.0
      %378 = vmatprep.subr.mxu0 0.0
      %379 = vmatpush2.msra.mxu0 0.0
      %380 = vmatprep.subr.mxu0 0.0
      %381 = vmatpush2.msra.mxu0 0.0
      %382 = vmatprep.subr.mxu0 0.0
      %383 = vmatpush2.msra.mxu0 0.0
      %384 = vmatprep.subr.mxu0 0.0
      %385 = vmatpush2.msra.mxu0 0.0
      %386 = vmatprep.subr.mxu0 0.0
      %387 = vmatpush2.msra.mxu0 0.0
      %388 = vmatprep.subr.mxu0 0.0
      %389 = vmatpush2.msra.mxu0 0.0
      %390 = vmatprep.subr.mxu0 0.0
      %391 = vmatpush2.msra.mxu0 0.0
      %392 = vmatprep.mubr.f32.mxu0 0.0
      %393 = vmatmul.mubr.f32.gmra.mxu0 %v311
      %v394 = vpop.f32.mrf.mxu0
      %v395 = vadd.f32 0.0, %v394
      %v396 = vpop.f32.mrf.mxu0
      %397 = vdwg.mxu0
      %v398 = vld [vmem:[%s3] sm:$0x3]
      %v400 = vrot.slane %v398, 4
      %vm402 = vcmask 1043456
      %v403 = vsel %vm402, %v395, %v400
      %vm404 = vcmask 48128
      %v406 = vsel %vm404, %v238, 0
      %v409 = vsel %vm404, %v239, 0
      %vm411 = vcmask 1045504
      %v413 = vsel %vm411, %v403, 0
      %415 = vmatprep.subr.mxu0 0.0
      %416 = vmatpush1.msra.mxu0 0.0
      %417 = vmatprep.subr.mxu0 0.0
      %418 = vmatpush1.msra.mxu0 0.0
      %419 = vmatprep.subr.mxu0 0.0
      %420 = vmatpush1.msra.mxu0 0.0
      %421 = vmatprep.subr.mxu0 0.0
      %422 = vmatpush1.msra.mxu0 0.0
      %423 = vmatprep.subr.mxu0 0.0
      %424 = vmatpush1.msra.mxu0 0.0
      %425 = vmatprep.subr.mxu0 0.0
      %426 = vmatpush1.msra.mxu0 0.0
      %427 = vmatprep.subr.mxu0 0.0
      %428 = vmatpush1.msra.mxu0 0.0
      %429 = vmatprep.subr.mxu0 0.0
      %430 = vmatpush1.msra.mxu0 0.0
      %431 = vmatprep.subr.mxu0 0.0
      %432 = vmatpush1.msra.mxu0 0.0
      %433 = vmatprep.subr.mxu0 0.0
      %434 = vmatpush1.msra.mxu0 0.0
      %435 = vmatprep.subr.mxu0 0.0
      %436 = vmatpush1.msra.mxu0 0.0
      %437 = vmatprep.subr.mxu0 0.0
      %438 = vmatpush1.msra.mxu0 0.0
      %439 = vmatprep.subr.mxu0 0.0
      %440 = vmatpush1.msra.mxu0 0.0
      %441 = vmatprep.subr.mxu0 0.0
      %442 = vmatpush1.msra.mxu0 0.0
      %443 = vmatprep.subr.mxu0 0.0
      %444 = vmatpush1.msra.mxu0 0.0
      %445 = vmatprep.subr.mxu0 0.0
      %446 = vmatpush1.msra.mxu0 %v413
      %447 = vmatprep.subr.mxu0 0.0
      %448 = vmatpush2.msra.mxu0 0.0
      %449 = vmatprep.subr.mxu0 0.0
      %450 = vmatpush2.msra.mxu0 0.0
      %451 = vmatprep.subr.mxu0 0.0
      %452 = vmatpush2.msra.mxu0 0.0
      %453 = vmatprep.subr.mxu0 0.0
      %454 = vmatpush2.msra.mxu0 0.0
      %455 = vmatprep.subr.mxu0 0.0
      %456 = vmatpush2.msra.mxu0 0.0
      %457 = vmatprep.subr.mxu0 0.0
      %458 = vmatpush2.msra.mxu0 0.0
      %459 = vmatprep.subr.mxu0 0.0
      %460 = vmatpush2.msra.mxu0 0.0
      %461 = vmatprep.subr.mxu0 0.0
      %462 = vmatpush2.msra.mxu0 0.0
      %463 = vmatprep.subr.mxu0 0.0
      %464 = vmatpush2.msra.mxu0 0.0
      %465 = vmatprep.subr.mxu0 0.0
      %466 = vmatpush2.msra.mxu0 0.0
      %467 = vmatprep.subr.mxu0 0.0
      %468 = vmatpush2.msra.mxu0 0.0
      %469 = vmatprep.subr.mxu0 0.0
      %470 = vmatpush2.msra.mxu0 0.0
      %471 = vmatprep.subr.mxu0 0.0
      %472 = vmatpush2.msra.mxu0 0.0
      %473 = vmatprep.subr.mxu0 0.0
      %474 = vmatpush2.msra.mxu0 0.0
      %475 = vmatprep.subr.mxu0 0.0
      %476 = vmatpush2.msra.mxu0 0.0
      %477 = vmatprep.subr.mxu0 0.0
      %478 = vmatpush2.msra.mxu0 0.0
      %479 = vmatprep.mubr.f32.mxu0 0.0
      %480 = vmatmul.mubr.f32.gmra.mxu0 %v406
      %v481 = vpop.f32.mrf.mxu0
      %v482 = vadd.f32 0.0, %v481
      %v483 = vpop.f32.mrf.mxu0
      %484 = vmatprep.mubr.f32.mxu0 0.0
      %485 = vmatmul.mubr.f32.gmra.mxu0 %v409
      %v486 = vpop.f32.mrf.mxu0
      %v487 = vadd.f32 0.0, %v486
      %v488 = vpop.f32.mrf.mxu0
      %489 = vdwg.mxu0
      %v490 = vld [vmem:[%s3] sm:$0x1]
      %v491 = vtanh.pop %v482
      %v492 = vtanh.pop %v487
      %v493 = vmul.f32 %v490, 0.0001
      %v494 = vlaneseq
      %v495 = vshrl.u32 %v494, 7
      %v496 = vsub.s32 0, %v495
      %v497 = vrot.slane %v493, %v496
      %v498 = vsub.f32 %v482, %v497
      %v499 = vsub.f32 %v487, %v497
      %v500 = vtanh.pop %v498
      %v501 = vtanh.pop %v499
      %v502 = vsub.f32 %v491, %v500
      %v503 = vsub.f32 %v492, %v501
      %v504 = vld [vmem:[%s4] sm:$0xff]
      %v505 = vld [vmem:[%s4 + $0x8] sm:$0xff]
      %v506 = vld [vmem:[%s4 + $0x10] sm:$0xff]
      %v507 = vld [vmem:[%s4 + $0x18] sm:$0xff]
      %v508 = vld [vmem:[%s4 + $0x20] sm:$0xff]
      %v509 = vld [vmem:[%s4 + $0x28] sm:$0xff]
      %v510 = vld [vmem:[%s4 + $0x30] sm:$0xff]
      %v511 = vld [vmem:[%s4 + $0x38] sm:$0xff]
      %v512 = vld [vmem:[%s4 + $0x40] sm:$0xff]
      %v513 = vld [vmem:[%s4 + $0x48] sm:$0xff]
      %v514 = vld [vmem:[%s4 + $0x50] sm:$0xff]
      %v515 = vld [vmem:[%s4 + $0x58] sm:$0xff]
      %v516 = vld [vmem:[%s4 + $0x60] sm:$0xff]
      %v517 = vld [vmem:[%s4 + $0x68] sm:$0xff]
      %v518 = vld [vmem:[%s4 + $0x70] sm:$0xff]
      %v519 = vld [vmem:[%s4 + $0x78] sm:$0xff]
      %520 = vmatprep.subr.mxu0 0.0
      %521 = vmatpush1.msra.mxu0 %v519
      %522 = vmatprep.subr.mxu0 0.0
      %523 = vmatpush1.msra.mxu0 %v518
      %524 = vmatprep.subr.mxu0 0.0
      %525 = vmatpush1.msra.mxu0 %v517
      %526 = vmatprep.subr.mxu0 0.0
      %527 = vmatpush1.msra.mxu0 %v516
      %528 = vmatprep.subr.mxu0 0.0
      %529 = vmatpush1.msra.mxu0 %v515
      %530 = vmatprep.subr.mxu0 0.0
      %531 = vmatpush1.msra.mxu0 %v514
      %532 = vmatprep.subr.mxu0 0.0
      %533 = vmatpush1.msra.mxu0 %v513
      %534 = vmatprep.subr.mxu0 0.0
      %535 = vmatpush1.msra.mxu0 %v512
      %536 = vmatprep.subr.mxu0 0.0
      %537 = vmatpush1.msra.mxu0 %v511
      %538 = vmatprep.subr.mxu0 0.0
      %539 = vmatpush1.msra.mxu0 %v510
      %540 = vmatprep.subr.mxu0 0.0
      %541 = vmatpush1.msra.mxu0 %v509
      %542 = vmatprep.subr.mxu0 0.0
      %543 = vmatpush1.msra.mxu0 %v508
      %544 = vmatprep.subr.mxu0 0.0
      %545 = vmatpush1.msra.mxu0 %v507
      %546 = vmatprep.subr.mxu0 0.0
      %547 = vmatpush1.msra.mxu0 %v506
      %548 = vmatprep.subr.mxu0 0.0
      %549 = vmatpush1.msra.mxu0 %v505
      %550 = vmatprep.subr.mxu0 0.0
      %551 = vmatpush1.msra.mxu0 %v504
      %552 = vmatprep.subr.mxu0 0.0
      %553 = vmatpush2.msra.mxu0 0.0
      %554 = vmatprep.subr.mxu0 0.0
      %555 = vmatpush2.msra.mxu0 0.0
      %556 = vmatprep.subr.mxu0 0.0
      %557 = vmatpush2.msra.mxu0 0.0
      %558 = vmatprep.subr.mxu0 0.0
      %559 = vmatpush2.msra.mxu0 0.0
      %560 = vmatprep.subr.mxu0 0.0
      %561 = vmatpush2.msra.mxu0 0.0
      %562 = vmatprep.subr.mxu0 0.0
      %563 = vmatpush2.msra.mxu0 0.0
      %564 = vmatprep.subr.mxu0 0.0
      %565 = vmatpush2.msra.mxu0 0.0
      %566 = vmatprep.subr.mxu0 0.0
      %567 = vmatpush2.msra.mxu0 0.0
      %568 = vmatprep.subr.mxu0 0.0
      %569 = vmatpush2.msra.mxu0 0.0
      %570 = vmatprep.subr.mxu0 0.0
      %571 = vmatpush2.msra.mxu0 0.0
      %572 = vmatprep.subr.mxu0 0.0
      %573 = vmatpush2.msra.mxu0 0.0
      %574 = vmatprep.subr.mxu0 0.0
      %575 = vmatpush2.msra.mxu0 0.0
      %576 = vmatprep.subr.mxu0 0.0
      %577 = vmatpush2.msra.mxu0 0.0
      %578 = vmatprep.subr.mxu0 0.0
      %579 = vmatpush2.msra.mxu0 0.0
      %580 = vmatprep.subr.mxu0 0.0
      %581 = vmatpush2.msra.mxu0 0.0
      %582 = vmatprep.subr.mxu0 0.0
      %583 = vmatpush2.msra.mxu0 0.0
      %584 = vmatprep.mubr.f32.mxu0 0.0
      %585 = vmatmul.mubr.f32.gmra.mxu0 %v502
      %v586 = vpop.f32.mrf.mxu0
      %v587 = vadd.f32 0.0, %v586
      %v588 = vpop.f32.mrf.mxu0
      %589 = vmatprep.mubr.f32.mxu0 0.0
      %590 = vmatmul.mubr.f32.gmra.mxu0 %v503
      %v591 = vpop.f32.mrf.mxu0
      %v592 = vadd.f32 0.0, %v591
      %v593 = vpop.f32.mrf.mxu0
      %594 = vdwg.mxu0
      %v595 = vand.u32 2147483647, %v587
      %v596 = vand.u32 2147483647, %v592
      %v597 = vadd.f32 %v595, %v596
      %598 = vadd.xlane.f32.xlu0 %v597
      %v599 = vpop.xlane.xlu0 %598
      %v600 = vrot.slane %v599, 4
      %v601 = vadd.f32 %v599, %v600
      %v602 = vrot.slane %v601, 2
      %v603 = vadd.f32 %v601, %v602
      %v604 = vrot.slane %v603, 1
      %v605 = vadd.f32 %v603, %v604
      %s606 = vtos %v605
      %s607 = ssub.f32 0.0, %s606
      %v608 = vrcp.pop 0.0001
      %s609 = vtos %v608
      %s610 = smul.f32 %s607, %s609
      %s611 = smul.f32 %s610, 0.5
      %s612 = sadd.f32 %s310, %s611
      %v613 = vstv %s612
      %614 = vst [vmem:[%s237] sm:$0x1] %v613
      %p615 = scmp.lt.s32.totalorder %s16, 3
      %s616 = scalar_select %p615, %s16, 3
      %s617 = scalar_lea.vmem %s5, %s616
      // Predicated region
      $region41: #{timestep_loss_batched.1} parent=39 // pred_check
        %p618 = pneg %p149
      $region42: #{timestep_loss_batched.1} parent=39 // pred_check_branch
        %620 = sbr.rel (%p618) target = $region44
      $region43: #{timestep_loss_batched.1} parent=39 // pred_region
        _
      $region44: #{timestep_loss_batched.1} parent=39 // pred_fallthru
        _
    $region40: #{timestep_loss_batched.1} parent=5 // pred_fallthru
      _
    %p621 = scmp.le.s32.totalorder 2, %s11
    // Predicated region
    $region45: #{timestep_loss_batched.1} parent=5 // pred_check
      %p622 = pneg %p621
    $region46: #{timestep_loss_batched.1} parent=5 // pred_check_branch
      %624 = sbr.rel (%p622) target = $region48
    $region47: #{timestep_loss_batched.1} parent=5 // pred_region
      %s625 = ssub.s32 %s11, 2
      // Predicated region
      $region49: #{timestep_loss_batched.1} parent=47 // pred_check
        %p626 = pneg %p155
      $region50: #{timestep_loss_batched.1} parent=47 // pred_check_branch
        %628 = sbr.rel (%p626) target = $region52
      $region51: #{timestep_loss_batched.1} parent=47 // pred_region
        %p629 = scmp.lt.s32.totalorder %s17, 3
        %s630 = scalar_select %p629, %s17, 3
        %s631 = scalar_lea.vmem %s5, %s630
      $region52: #{timestep_loss_batched.1} parent=47 // pred_fallthru
        _
    $region48: #{timestep_loss_batched.1} parent=5 // pred_fallthru
      _
  $region6: #{timestep_loss_batched.1} parent=0 // loop_footer
    %s15 = sadd.s32 1, %s11
  $region7: #{timestep_loss_batched.1} parent=0 // loop_footer_branch
    %10 = sbr.rel target = $region3
  $region8: #{timestep_loss_batched.1} parent=0 // loop_exit
    _

</llo_original>
